<compile_context>
chip_gen: v5e
topology: v5e:2x2
jax: 0.10.0
libtpu: 0.0.40
codegen_flags: <defaults>
</compile_context>

<pallas_src>
import functools

import jax
import jax.numpy as jnp
from jax import lax
from jax.experimental import pallas as pl
from jax.experimental.pallas import tpu as pltpu

LOG_SIGMA_MIN = -20.0
LOG_SIGMA_MAX = 10.0
LANE = 128
SUBLANE = 8


def _round_up(x, m):
    return (x + m - 1) // m * m


def _pad_to(x, rows, cols):
    pr = rows - x.shape[0]
    pc = cols - x.shape[1]
    if pr == 0 and pc == 0:
        return x
    return jnp.pad(x, ((0, pr), (0, pc)))


@functools.lru_cache(maxsize=1)
def _default_vmem_limit_bytes():
    """Generation-aware VMEM budget: ~3/4 of physical VMEM (≈96 MiB on 128 MiB v5e/v6e,
    ≈48 MiB on 64 MiB v7x), with a conservative 48 MiB fallback if the query fails."""
    try:
        cap = int(pltpu.get_tpu_info().vmem_capacity_bytes)
        if cap > 0:
            return int(min(cap * 3 // 4, 100 * 1024 * 1024))
    except Exception:
        pass
    return 48 * 1024 * 1024


def _policy_mlp_kernel(action_dim,
                       obs_ref,
                       w1_ref, b1_ref,
                       w2_ref, b2_ref,
                       wh_ref, bh_ref,
                       out_ref):
    """One batch tile of: fc1 -> ReLU -> fc2 -> ReLU -> fused {mu | log_sigma} head.

    The two heads are a single lane-dense matmul; the log_sigma columns
    [action_dim, 2*action_dim) are clamped to [-20, 10] in-kernel. MXU matmuls
    accumulate in f32; activations are down-cast back to the weight dtype inside
    the ReLU so only one copy of each tb x hidden intermediate stays live.
    """
    x = obs_ref[...].astype(w1_ref.dtype)

    h1 = jnp.dot(x, w1_ref[...], preferred_element_type=jnp.float32)
    h1 = jnp.maximum(h1 + b1_ref[...].astype(jnp.float32), 0.0).astype(w2_ref.dtype)

    h2 = jnp.dot(h1, w2_ref[...], preferred_element_type=jnp.float32)
    h2 = jnp.maximum(h2 + b2_ref[...].astype(jnp.float32), 0.0).astype(wh_ref.dtype)

    head = jnp.dot(h2, wh_ref[...], preferred_element_type=jnp.float32)
    head = head + bh_ref[...].astype(jnp.float32)

    # Clamp only the log_sigma half of the fused head (mu is left untouched).
    col = lax.broadcasted_iota(jnp.int32, head.shape, dimension=1)
    is_log_sigma = (col >= action_dim) & (col < 2 * action_dim)
    head = jnp.where(is_log_sigma,
                     jnp.clip(head, LOG_SIGMA_MIN, LOG_SIGMA_MAX),
                     head)

    out_ref[...] = head.astype(out_ref.dtype)


def prepare_params(params, compute_dtype=None):
    """Pad / fuse the weights ONCE (hoisted out of the per-call forward path).

    Returns (prepared, action_dim):
      w1 [obs_dim, hid_p], w2 [hid_p, hid_p], wh [hid_p, head_p] (mu | log_sigma fused),
      biases b* [1, dim]; hid_p/head_p are 128-lane aligned.  The obs/K dimension is left
      at its native width (full-dim blocks are legal), so obs is never lane-padded.
      bf16 compute_dtype is the intended fast path (MXU-native); f32 is the exact path.
    """
    if compute_dtype is None:
        compute_dtype = params["w1"].dtype
    obs_dim, hidden_dim = params["w1"].shape
    action_dim = params["wmu"].shape[1]
    hid_p = _round_up(hidden_dim, LANE)
    head_p = _round_up(2 * action_dim, LANE)
    cast = lambda a: a.astype(compute_dtype)
    prepared = dict(
        w1=_pad_to(cast(params["w1"]), obs_dim, hid_p),
        b1=_pad_to(cast(params["b1"]), 1, hid_p),
        w2=_pad_to(cast(params["w2"]), hid_p, hid_p),
        b2=_pad_to(cast(params["b2"]), 1, hid_p),
        wh=_pad_to(cast(jnp.concatenate([params["wmu"], params["wls"]], axis=1)), hid_p, head_p),
        bh=_pad_to(cast(jnp.concatenate([params["bmu"], params["bls"]], axis=1)), 1, head_p),
    )
    # TODO(synk): on v7x, fp8 weight storage for w1/w2/wh would double MXU throughput and
    # halve resident VMEM, but is not portable to v5e/v6e.
    return prepared, action_dim


@functools.partial(jax.jit, static_argnames=("action_dim", "batch_tile", "out_dtype"))
def policy_forward(obs, prepared, action_dim, batch_tile=512, out_dtype=jnp.float32):
    """Pallas implementation of PolicyNetwork.forward.

    obs: [B, obs_dim] float32 (cast to the weight dtype for the MXU).
    prepared: output of prepare_params (pre-padded, head-fused weights).
    Returns (mu, log_sigma), each [B, action_dim] float32.
    Set out_dtype=jnp.bfloat16 to halve the head-output HBM writeback when the
    downstream sampler tolerates it.
    """
    B, obs_dim = obs.shape
    w1, b1 = prepared["w1"], prepared["b1"]
    w2, b2 = prepared["w2"], prepared["b2"]
    wh, bh = prepared["wh"], prepared["bh"]
    assert w1.shape[0] == obs_dim, "obs width must match prepared w1"
    hid_p = w1.shape[1]
    head_p = wh.shape[1]
    compute_dtype = w1.dtype

    # Batch tile: sublane-aligned; aim for >= 2 tiles so the "parallel" batch axis can
    # shard across v7x's 2 TensorCores (free on single-TC v5e/v6e).  Default 512 rows
    # amortizes the ~0.35 us per-grid-step overhead at large B.
    tb = min(batch_tile, _round_up(max((B + 1) // 2, SUBLANE), SUBLANE))
    b_p = _round_up(B, tb)
    num_tiles = b_p // tb

    obs_pad = obs.astype(compute_dtype)
    if b_p != B:
        obs_pad = jnp.pad(obs_pad, ((0, b_p - B), (0, 0)))

    itemsize = jnp.dtype(compute_dtype).itemsize
    out_itemsize = jnp.dtype(out_dtype).itemsize
    flops = 2 * b_p * (obs_dim * hid_p + hid_p * hid_p + hid_p * head_p)
    bytes_accessed = (
        b_p * obs_dim * itemsize                                              # obs in (native width)
        + (obs_dim * hid_p + hid_p * hid_p + hid_p * head_p) * itemsize       # weights
        + (2 * hid_p + head_p) * itemsize                                     # biases
        + b_p * head_p * out_itemsize                                         # fused head out
    )
    cost = pl.CostEstimate(flops=int(flops), transcendentals=0,
                           bytes_accessed=int(bytes_accessed))

    kernel = functools.partial(_policy_mlp_kernel, action_dim)
    # Constant-index blocks: single-buffered (index_map never changes), halving their
    # resident VMEM footprint vs the default double buffering.
    resident = functools.partial(pl.BlockSpec, pipeline_mode=pl.Buffered(buffer_count=1))

    out = pl.pallas_call(
        kernel,
        out_shape=jax.ShapeDtypeStruct((b_p, head_p), out_dtype),
        grid_spec=pltpu.PrefetchScalarGridSpec(
            num_scalar_prefetch=0,
            grid=(num_tiles,),
            in_specs=[
                pl.BlockSpec((tb, obs_dim), lambda i: (i, 0)),     # obs tile, native width (pipelined)
                resident((obs_dim, hid_p), lambda i: (0, 0)),      # w1 (VMEM-resident, 1 buffer)
                resident((1, hid_p), lambda i: (0, 0)),            # b1
                resident((hid_p, hid_p), lambda i: (0, 0)),        # w2
                resident((1, hid_p), lambda i: (0, 0)),            # b2
                resident((hid_p, head_p), lambda i: (0, 0)),       # fused head weight
                resident((1, head_p), lambda i: (0, 0)),           # fused head bias
            ],
            out_specs=pl.BlockSpec((tb, head_p), lambda i: (i, 0)),
        ),
        compiler_params=pltpu.CompilerParams(
            dimension_semantics=("parallel",),              # shards batch tiles across v7x's 2 TCs
            vmem_limit_bytes=_default_vmem_limit_bytes(),   # ~96 MiB on v5e/v6e, ~48 MiB on v7x
        ),
        cost_estimate=cost,
    )(obs_pad, w1, b1, w2, b2, wh, bh)

    mu = out[:B, :action_dim].astype(jnp.float32)
    log_sigma = out[:B, action_dim:2 * action_dim].astype(jnp.float32)
    return mu, log_sigma


def init_params(key, obs_dim, action_dim, hidden_dim, dtype=jnp.float32):
    """Mirror nn.Linear default init (uniform +/- 1/sqrt(fan_in)); weights stored [in, out]."""
    def linear(k, fan_in, fan_out):
        kw, kb = jax.random.split(k)
        bound = 1.0 / jnp.sqrt(fan_in)
        w = jax.random.uniform(kw, (fan_in, fan_out), jnp.float32, -bound, bound)
        b = jax.random.uniform(kb, (1, fan_out), jnp.float32, -bound, bound)
        return w.astype(dtype), b.astype(dtype)

    k1, k2, k3, k4 = jax.random.split(key, 4)
    w1, b1 = linear(k1, obs_dim, hidden_dim)
    w2, b2 = linear(k2, hidden_dim, hidden_dim)
    wmu, bmu = linear(k3, hidden_dim, action_dim)
    wls, bls = linear(k4, hidden_dim, action_dim)
    return dict(w1=w1, b1=b1, w2=w2, b2=b2, wmu=wmu, bmu=bmu, wls=wls, bls=bls)


def reference_forward(obs, params):
    """Pure-JAX (f32) reference for correctness checking."""
    h1 = jnp.maximum(obs @ params["w1"] + params["b1"], 0.0)
    h2 = jnp.maximum(h1 @ params["w2"] + params["b2"], 0.0)
    mu = h2 @ params["wmu"] + params["bmu"]
    log_sigma = jnp.clip(h2 @ params["wls"] + params["bls"], LOG_SIGMA_MIN, LOG_SIGMA_MAX)
    return mu, log_sigma


if __name__ == "__main__":
    # Small SAC-ish shapes: obs_dim=16, action_dim=8, hidden_dim=32, batch=2.
    obs_dim, action_dim, hidden_dim, batch = 16, 8, 32, 2

    key = jax.random.PRNGKey(0)
    k_params, k_obs = jax.random.split(key)
    params = init_params(k_params, obs_dim, action_dim, hidden_dim, dtype=jnp.float32)
    obs = jax.random.normal(k_obs, (batch, obs_dim), jnp.float32)

    # f32 exact path: weights padded/fused once, then reused every call.
    prepared_f32, act_dim = prepare_params(params)
    mu, log_sigma = policy_forward(obs, prepared_f32, act_dim)
    jax.block_until_ready((mu, log_sigma))

    mu_ref, ls_ref = reference_forward(obs, params)
    assert mu.shape == (batch, action_dim) and log_sigma.shape == (batch, action_dim)
    assert jnp.allclose(mu, mu_ref, atol=1e-5, rtol=1e-5)
    assert jnp.allclose(log_sigma, ls_ref, atol=1e-5, rtol=1e-5)

    # bf16 fast path (MXU-native on v5e/v6e/v7x) with f32 accumulation: loose check.
    # Note: obs is down-cast to bf16 before the first matmul on this path (intended).
    prepared_bf16, _ = prepare_params(params, compute_dtype=jnp.bfloat16)
    mu_b, ls_b = policy_forward(obs, prepared_bf16, act_dim)
    jax.block_until_ready((mu_b, ls_b))
    assert jnp.allclose(mu_b, mu_ref, atol=1e-1, rtol=1e-1)
    assert jnp.allclose(ls_b, ls_ref, atol=1e-1, rtol=1e-1)

    # TODO(synk): sample_actions (rsample/tanh/log_prob) is stochastic-sampling glue, not part
    # of forward(); compose it in plain JAX on top of (mu, log_sigma).
    print("KERNEL_OK")
</pallas_src>

<mosaic_0001>
module attributes {stable_mosaic.version = 11 : i64} {
  func.func @_policy_mlp_kernel(%arg0: i32, %arg1: memref<8x16xf32, #tpu.memory_space<vmem>>, %arg2: memref<16x128xf32, #tpu.memory_space<vmem>>, %arg3: memref<1x128xf32, #tpu.memory_space<vmem>>, %arg4: memref<128x128xf32, #tpu.memory_space<vmem>>, %arg5: memref<1x128xf32, #tpu.memory_space<vmem>>, %arg6: memref<128x128xf32, #tpu.memory_space<vmem>>, %arg7: memref<1x128xf32, #tpu.memory_space<vmem>>, %arg8: memref<8x128xf32, #tpu.memory_space<vmem>>) attributes {dimension_semantics = [#tpu.dimension_semantics<parallel>], iteration_bounds = array<i64: 1>, scalar_prefetch = 0 : i64, scratch_operands = 0 : i64, tpu.core_type = #tpu.core_type<tc>, window_params = [{transform_indices = @transform_0, window_bounds = array<i64: 8, 16>}, {pipeline_mode = #tpu.pipeline_mode<synchronous>, transform_indices = @transform_1, window_bounds = array<i64: 16, 128>}, {pipeline_mode = #tpu.pipeline_mode<synchronous>, transform_indices = @transform_2, window_bounds = array<i64: 1, 128>}, {pipeline_mode = #tpu.pipeline_mode<synchronous>, transform_indices = @transform_3, window_bounds = array<i64: 128, 128>}, {pipeline_mode = #tpu.pipeline_mode<synchronous>, transform_indices = @transform_4, window_bounds = array<i64: 1, 128>}, {pipeline_mode = #tpu.pipeline_mode<synchronous>, transform_indices = @transform_5, window_bounds = array<i64: 128, 128>}, {pipeline_mode = #tpu.pipeline_mode<synchronous>, transform_indices = @transform_6, window_bounds = array<i64: 1, 128>}, {transform_indices = @transform_7, window_bounds = array<i64: 8, 128>}]} {
    %c0 = arith.constant 0 : index
    %c0_0 = arith.constant 0 : index
    %0 = vector.load %arg1[%c0, %c0_0] : memref<8x16xf32, #tpu.memory_space<vmem>>, vector<8x16xf32>
    %c0_1 = arith.constant 0 : index
    %c0_2 = arith.constant 0 : index
    %1 = vector.load %arg2[%c0_1, %c0_2] : memref<16x128xf32, #tpu.memory_space<vmem>>, vector<16x128xf32>
    %cst = arith.constant dense<0.000000e+00> : vector<8x128xf32>
    %2 = tpu.matmul %0, %1, %cst {dimension_numbers = #tpu.dot_dimension_numbers<[1], [0], [0], [1], [0, 0, 1, 1], [], []>} : vector<8x16xf32>, vector<16x128xf32>, vector<8x128xf32> -> vector<8x128xf32>
    %c0_3 = arith.constant 0 : index
    %c0_4 = arith.constant 0 : index
    %3 = vector.load %arg3[%c0_3, %c0_4] : memref<1x128xf32, #tpu.memory_space<vmem>>, vector<1x128xf32>
    %4 = vector.broadcast %3 : vector<1x128xf32> to vector<8x128xf32>
    %5 = arith.addf %2, %4 : vector<8x128xf32>
    %cst_5 = arith.constant 0.000000e+00 : f32
    %6 = vector.broadcast %cst_5 : f32 to vector<8x128xf32>
    %7 = arith.maximumf %5, %6 : vector<8x128xf32>
    %c0_6 = arith.constant 0 : index
    %c0_7 = arith.constant 0 : index
    %8 = vector.load %arg4[%c0_6, %c0_7] : memref<128x128xf32, #tpu.memory_space<vmem>>, vector<128x128xf32>
    %cst_8 = arith.constant dense<0.000000e+00> : vector<8x128xf32>
    %9 = tpu.matmul %7, %8, %cst_8 {dimension_numbers = #tpu.dot_dimension_numbers<[1], [0], [0], [1], [0, 0, 1, 1], [], []>} : vector<8x128xf32>, vector<128x128xf32>, vector<8x128xf32> -> vector<8x128xf32>
    %c0_9 = arith.constant 0 : index
    %c0_10 = arith.constant 0 : index
    %10 = vector.load %arg5[%c0_9, %c0_10] : memref<1x128xf32, #tpu.memory_space<vmem>>, vector<1x128xf32>
    %11 = vector.broadcast %10 : vector<1x128xf32> to vector<8x128xf32>
    %12 = arith.addf %9, %11 : vector<8x128xf32>
    %cst_11 = arith.constant 0.000000e+00 : f32
    %13 = vector.broadcast %cst_11 : f32 to vector<8x128xf32>
    %14 = arith.maximumf %12, %13 : vector<8x128xf32>
    %c0_12 = arith.constant 0 : index
    %c0_13 = arith.constant 0 : index
    %15 = vector.load %arg6[%c0_12, %c0_13] : memref<128x128xf32, #tpu.memory_space<vmem>>, vector<128x128xf32>
    %cst_14 = arith.constant dense<0.000000e+00> : vector<8x128xf32>
    %16 = tpu.matmul %14, %15, %cst_14 {dimension_numbers = #tpu.dot_dimension_numbers<[1], [0], [0], [1], [0, 0, 1, 1], [], []>} : vector<8x128xf32>, vector<128x128xf32>, vector<8x128xf32> -> vector<8x128xf32>
    %c0_15 = arith.constant 0 : index
    %c0_16 = arith.constant 0 : index
    %17 = vector.load %arg7[%c0_15, %c0_16] : memref<1x128xf32, #tpu.memory_space<vmem>>, vector<1x128xf32>
    %18 = vector.broadcast %17 : vector<1x128xf32> to vector<8x128xf32>
    %19 = arith.addf %16, %18 : vector<8x128xf32>
    %20 = tpu.iota {dimensions = array<i32: 1>} : vector<8x128xi32>
    %c8_i32 = arith.constant 8 : i32
    %21 = vector.broadcast %c8_i32 : i32 to vector<8x128xi32>
    %22 = arith.cmpi sge, %20, %21 : vector<8x128xi32>
    %c16_i32 = arith.constant 16 : i32
    %23 = vector.broadcast %c16_i32 : i32 to vector<8x128xi32>
    %24 = arith.cmpi slt, %20, %23 : vector<8x128xi32>
    %25 = arith.andi %22, %24 : vector<8x128xi1>
    %cst_17 = arith.constant -2.000000e+01 : f32
    %cst_18 = arith.constant 1.000000e+01 : f32
    %26 = vector.broadcast %cst_17 : f32 to vector<8x128xf32>
    %27 = arith.maximumf %26, %19 : vector<8x128xf32>
    %28 = vector.broadcast %cst_18 : f32 to vector<8x128xf32>
    %29 = arith.minimumf %28, %27 : vector<8x128xf32>
    %30 = arith.select %25, %29, %19 : vector<8x128xi1>, vector<8x128xf32>
    %c0_19 = arith.constant 0 : index
    %c0_20 = arith.constant 0 : index
    %31 = vector.load %arg8[%c0_19, %c0_20] : memref<8x128xf32, #tpu.memory_space<vmem>>, vector<8x128xf32>
    tpu.vector_store %arg8[%c0_19, %c0_20], %30 {strides = array<i32>} : memref<8x128xf32, #tpu.memory_space<vmem>>, vector<8x128xf32>,
    return
  }
  func.func @transform_0(%arg0: i32) -> (i32, i32) {
    %c0_i32 = arith.constant 0 : i32
    %c0_i32_0 = arith.constant 0 : i32
    return %arg0, %c0_i32 : i32, i32
  }
  func.func @transform_1(%arg0: i32) -> (i32, i32) {
    %c0_i32 = arith.constant 0 : i32
    %c0_i32_0 = arith.constant 0 : i32
    %c0_i32_1 = arith.constant 0 : i32
    return %c0_i32, %c0_i32_0 : i32, i32
  }
  func.func @transform_2(%arg0: i32) -> (i32, i32) {
    %c0_i32 = arith.constant 0 : i32
    %c0_i32_0 = arith.constant 0 : i32
    %c0_i32_1 = arith.constant 0 : i32
    return %c0_i32, %c0_i32_0 : i32, i32
  }
  func.func @transform_3(%arg0: i32) -> (i32, i32) {
    %c0_i32 = arith.constant 0 : i32
    %c0_i32_0 = arith.constant 0 : i32
    %c0_i32_1 = arith.constant 0 : i32
    return %c0_i32, %c0_i32_0 : i32, i32
  }
  func.func @transform_4(%arg0: i32) -> (i32, i32) {
    %c0_i32 = arith.constant 0 : i32
    %c0_i32_0 = arith.constant 0 : i32
    %c0_i32_1 = arith.constant 0 : i32
    return %c0_i32, %c0_i32_0 : i32, i32
  }
  func.func @transform_5(%arg0: i32) -> (i32, i32) {
    %c0_i32 = arith.constant 0 : i32
    %c0_i32_0 = arith.constant 0 : i32
    %c0_i32_1 = arith.constant 0 : i32
    return %c0_i32, %c0_i32_0 : i32, i32
  }
  func.func @transform_6(%arg0: i32) -> (i32, i32) {
    %c0_i32 = arith.constant 0 : i32
    %c0_i32_0 = arith.constant 0 : i32
    %c0_i32_1 = arith.constant 0 : i32
    return %c0_i32, %c0_i32_0 : i32, i32
  }
  func.func @transform_7(%arg0: i32) -> (i32, i32) {
    %c0_i32 = arith.constant 0 : i32
    %c0_i32_0 = arith.constant 0 : i32
    return %arg0, %c0_i32 : i32, i32
  }
}

</mosaic_0001>

<llo_original>
// kernel: policy_forward.1
$region0: #{policy_forward.1}
  #allocation0 [shape = 'u32[]', space=smem, size = 0x4, offset = 0x4, fixed_abs, tag = 'smem constant byte address 0x4 - core index']
  #allocation1 [shape = 'u32[72,128]{1,0:T(1,128)}', space=vmem, size = 0x9000, scoped, tag = 'internal scratch']
  %s0 = inlined_call_operand.vmem [shape: f32[8,16], index: 0, kind: input, shape index: {}]
  %s1 = inlined_call_operand.hbm [shape: f32[16,128], index: 1, kind: input, shape index: {}]
  %s2 = inlined_call_operand.vmem [shape: f32[1,128], index: 2, kind: input, shape index: {}]
  %s3 = inlined_call_operand.hbm [shape: f32[128,128], index: 3, kind: input, shape index: {}]
  %s4 = inlined_call_operand.vmem [shape: f32[1,128], index: 4, kind: input, shape index: {}]
  %s5 = inlined_call_operand.hbm [shape: f32[128,128], index: 5, kind: input, shape index: {}]
  %s6 = inlined_call_operand.vmem [shape: f32[1,128], index: 6, kind: input, shape index: {}]
  %s7 = inlined_call_operand.vmem [shape: f32[8,128], index: 7, kind: output, shape index: {}]
  %s8 = sld [smem:[#allocation0]]
  $region50: #{policy_forward.1} parent=0
    _
  %s10 = ssub.s32 1, %s8
  %s11 = scalar_select 0, %s10, %s8
  $region1: #{policy_forward.1} parent=0
    #allocation2 [shape = 'u8[8192]{0}', space=vmem, size = 0x2000, scoped, tag = 'input window, operand 1, single buffered']
    #allocation3 [shape = 's32[1]{0}', space=sflag, size = 0x4, scoped, tag = 'scoped memory for policy_forward.1']
    #allocation4 [shape = 'u8[65536]{0}', space=vmem, size = 0x10000, scoped, tag = 'input window, operand 3, single buffered']
    #allocation5 [shape = 's32[1]{0}', space=sflag, size = 0x4, scoped, tag = 'scoped memory for policy_forward.1']
    #allocation6 [shape = 'u8[65536]{0}', space=vmem, size = 0x10000, scoped, tag = 'input window, operand 5, single buffered']
    %12 = vsyncpa [#allocation3], 0
    %13 = vsyncpa [#allocation5], 0
    // Predicated region
    $region2: #{policy_forward.1} parent=1 // pred_check
      _
    $region3: #{policy_forward.1} parent=1 // pred_check_branch
      %15 = sbr.rel (0) target = $region5
    $region4: #{policy_forward.1} parent=1 // pred_region
      _
    $region5: #{policy_forward.1} parent=1 // pred_fallthru
      _
    // Predicated region
    $region6: #{policy_forward.1} parent=1 // pred_check
      _
    $region7: #{policy_forward.1} parent=1 // pred_check_branch
      %17 = sbr.rel (0) target = $region9
    $region8: #{policy_forward.1} parent=1 // pred_region
      %19 = vsyncadd [#allocation3], 0
      %s20 = sshll.u32 %s1, 4
      %s21 = int_to_ptr.hbm [resolvable:$true] %s20
      %s22 = sshll.u32 [#allocation2], 4
      %s23 = int_to_ptr.vmem [resolvable:$true] %s22
      %28 = dma.hbm_to_vmem [thread:$0]  %s21, 256, %s23, [#allocation3], 128, 128, 8
    $region9: #{policy_forward.1} parent=1 // pred_fallthru
      _
    // Predicated region
    $region10: #{policy_forward.1} parent=1 // pred_check
      _
    $region11: #{policy_forward.1} parent=1 // pred_check_branch
      %30 = sbr.rel (0) target = $region13
    $region12: #{policy_forward.1} parent=1 // pred_region
      _
    $region13: #{policy_forward.1} parent=1 // pred_fallthru
      _
    // Predicated region
    $region14: #{policy_forward.1} parent=1 // pred_check
      _
    $region15: #{policy_forward.1} parent=1 // pred_check_branch
      %32 = sbr.rel (0) target = $region17
    $region16: #{policy_forward.1} parent=1 // pred_region
      %34 = vsyncadd [#allocation5], 0
      %s35 = sshll.u32 %s3, 4
      %s36 = int_to_ptr.hbm [resolvable:$true] %s35
      %s37 = sshll.u32 [#allocation4], 4
      %s38 = int_to_ptr.vmem [resolvable:$true] %s37
      %43 = dma.hbm_to_vmem [thread:$0]  %s36, 2048, %s38, [#allocation5], 128, 128, 8
    $region17: #{policy_forward.1} parent=1 // pred_fallthru
      _
    // Predicated region
    $region18: #{policy_forward.1} parent=1 // pred_check
      _
    $region19: #{policy_forward.1} parent=1 // pred_check_branch
      %45 = sbr.rel (0) target = $region21
    $region20: #{policy_forward.1} parent=1 // pred_region
      _
    $region21: #{policy_forward.1} parent=1 // pred_fallthru
      _
    // Predicated region
    $region22: #{policy_forward.1} parent=1 // pred_check
      _
    $region23: #{policy_forward.1} parent=1 // pred_check_branch
      %47 = sbr.rel (0) target = $region25
    $region24: #{policy_forward.1} parent=1 // pred_region
      %49 = vsyncadd [#allocation5], 0
      %s50 = sshll.u32 %s5, 4
      %s51 = int_to_ptr.hbm [resolvable:$true] %s50
      %s52 = sshll.u32 [#allocation6], 4
      %s53 = int_to_ptr.vmem [resolvable:$true] %s52
      %58 = dma.hbm_to_vmem [thread:$0]  %s51, 2048, %s53, [#allocation5], 128, 128, 8
    $region25: #{policy_forward.1} parent=1 // pred_fallthru
      _
    // Predicated region
    $region26: #{policy_forward.1} parent=1 // pred_check
      _
    $region27: #{policy_forward.1} parent=1 // pred_check_branch
      %60 = sbr.rel (0) target = $region29
    $region28: #{policy_forward.1} parent=1 // pred_region
      _
    $region29: #{policy_forward.1} parent=1 // pred_fallthru
      _
    // Predicated region
    $region30: #{policy_forward.1} parent=1 // pred_check
      _
    $region31: #{policy_forward.1} parent=1 // pred_check_branch
      %62 = sbr.rel (0) target = $region33
    $region32: #{policy_forward.1} parent=1 // pred_region
      %64 = dma.done [#allocation3], 256
    $region33: #{policy_forward.1} parent=1 // pred_fallthru
      _
    // Predicated region
    $region34: #{policy_forward.1} parent=1 // pred_check
      _
    $region35: #{policy_forward.1} parent=1 // pred_check_branch
      %66 = sbr.rel (0) target = $region37
    $region36: #{policy_forward.1} parent=1 // pred_region
      %68 = dma.done [#allocation5], 2048
    $region37: #{policy_forward.1} parent=1 // pred_fallthru
      _
    // Predicated region
    $region38: #{policy_forward.1} parent=1 // pred_check
      _
    $region39: #{policy_forward.1} parent=1 // pred_check_branch
      %70 = sbr.rel (0) target = $region41
    $region40: #{policy_forward.1} parent=1 // pred_region
      %72 = dma.done [#allocation5], 2048
    $region41: #{policy_forward.1} parent=1 // pred_fallthru
      _
    %v73 = vld [vmem:[%s0] sm:$0xff]
    %v74 = vld [vmem:[#allocation2] sm:$0xff]
    %v75 = vld [vmem:[#allocation2 + $0x8] sm:$0xff]
    %v76 = vld [vmem:[%s2] sm:$0x1]
    %v78 = vperm.slane %v76, 0
    %vm80 = vcmask 130048
    %v82 = vsel %vm80, %v73, 0
    %84 = vmatpush.msra.mxu0 0.0
    %85 = vmatpush.msra.mxu0 0.0
    %86 = vmatpush.msra.mxu0 0.0
    %87 = vmatpush.msra.mxu0 0.0
    %88 = vmatpush.msra.mxu0 0.0
    %89 = vmatpush.msra.mxu0 0.0
    %90 = vmatpush.msra.mxu0 0.0
    %91 = vmatpush.msra.mxu0 0.0
    %92 = vmatpush.msra.mxu0 0.0
    %93 = vmatpush.msra.mxu0 0.0
    %94 = vmatpush.msra.mxu0 0.0
    %95 = vmatpush.msra.mxu0 0.0
    %96 = vmatpush.msra.mxu0 0.0
    %97 = vmatpush.msra.mxu0 0.0
    %98 = vmatpush.msra.mxu0 %v75
    %99 = vmatpush.msra.mxu0 %v74
    %100 = vmatmul.f32.gmra.mxu0 %v82
    %v101 = vpop.f32.mrf.mxu0
    %v102 = vadd.f32 %v78, %v101
    %103 = vdwg.mxu0
    %v104 = vmax.f32 %v102, 0.0
    %v105 = vld [vmem:[#allocation4] sm:$0xff]
    %v106 = vld [vmem:[#allocation4 + $0x8] sm:$0xff]
    %v107 = vld [vmem:[#allocation4 + $0x10] sm:$0xff]
    %v108 = vld [vmem:[#allocation4 + $0x18] sm:$0xff]
    %v109 = vld [vmem:[#allocation4 + $0x20] sm:$0xff]
    %v110 = vld [vmem:[#allocation4 + $0x28] sm:$0xff]
    %v111 = vld [vmem:[#allocation4 + $0x30] sm:$0xff]
    %v112 = vld [vmem:[#allocation4 + $0x38] sm:$0xff]
    %v113 = vld [vmem:[#allocation4 + $0x40] sm:$0xff]
    %v114 = vld [vmem:[#allocation4 + $0x48] sm:$0xff]
    %v115 = vld [vmem:[#allocation4 + $0x50] sm:$0xff]
    %v116 = vld [vmem:[#allocation4 + $0x58] sm:$0xff]
    %v117 = vld [vmem:[#allocation4 + $0x60] sm:$0xff]
    %v118 = vld [vmem:[#allocation4 + $0x68] sm:$0xff]
    %v119 = vld [vmem:[#allocation4 + $0x70] sm:$0xff]
    %v120 = vld [vmem:[#allocation4 + $0x78] sm:$0xff]
    %v121 = vld [vmem:[%s4] sm:$0x1]
    %v123 = vperm.slane %v121, 0
    %125 = vmatpush.msra.mxu0 %v120
    %126 = vmatpush.msra.mxu0 %v119
    %127 = vmatpush.msra.mxu0 %v118
    %128 = vmatpush.msra.mxu0 %v117
    %129 = vmatpush.msra.mxu0 %v116
    %130 = vmatpush.msra.mxu0 %v115
    %131 = vmatpush.msra.mxu0 %v114
    %132 = vmatpush.msra.mxu0 %v113
    %133 = vmatpush.msra.mxu0 %v112
    %134 = vmatpush.msra.mxu0 %v111
    %135 = vmatpush.msra.mxu0 %v110
    %136 = vmatpush.msra.mxu0 %v109
    %137 = vmatpush.msra.mxu0 %v108
    %138 = vmatpush.msra.mxu0 %v107
    %139 = vmatpush.msra.mxu0 %v106
    %140 = vmatpush.msra.mxu0 %v105
    %141 = vmatmul.f32.gmra.mxu0 %v104
    %v142 = vpop.f32.mrf.mxu0
    %v143 = vadd.f32 %v123, %v142
    %144 = vdwg.mxu0
    %v145 = vmax.f32 %v143, 0.0
    %v146 = vld [vmem:[#allocation6] sm:$0xff]
    %v147 = vld [vmem:[#allocation6 + $0x8] sm:$0xff]
    %v148 = vld [vmem:[#allocation6 + $0x10] sm:$0xff]
    %v149 = vld [vmem:[#allocation6 + $0x18] sm:$0xff]
    %v150 = vld [vmem:[#allocation6 + $0x20] sm:$0xff]
    %v151 = vld [vmem:[#allocation6 + $0x28] sm:$0xff]
    %v152 = vld [vmem:[#allocation6 + $0x30] sm:$0xff]
    %v153 = vld [vmem:[#allocation6 + $0x38] sm:$0xff]
    %v154 = vld [vmem:[#allocation6 + $0x40] sm:$0xff]
    %v155 = vld [vmem:[#allocation6 + $0x48] sm:$0xff]
    %v156 = vld [vmem:[#allocation6 + $0x50] sm:$0xff]
    %v157 = vld [vmem:[#allocation6 + $0x58] sm:$0xff]
    %v158 = vld [vmem:[#allocation6 + $0x60] sm:$0xff]
    %v159 = vld [vmem:[#allocation6 + $0x68] sm:$0xff]
    %v160 = vld [vmem:[#allocation6 + $0x70] sm:$0xff]
    %v161 = vld [vmem:[#allocation6 + $0x78] sm:$0xff]
    %v162 = vld [vmem:[%s6] sm:$0x1]
    %v164 = vperm.slane %v162, 0
    %166 = vmatpush.msra.mxu0 %v161
    %167 = vmatpush.msra.mxu0 %v160
    %168 = vmatpush.msra.mxu0 %v159
    %169 = vmatpush.msra.mxu0 %v158
    %170 = vmatpush.msra.mxu0 %v157
    %171 = vmatpush.msra.mxu0 %v156
    %172 = vmatpush.msra.mxu0 %v155
    %173 = vmatpush.msra.mxu0 %v154
    %174 = vmatpush.msra.mxu0 %v153
    %175 = vmatpush.msra.mxu0 %v152
    %176 = vmatpush.msra.mxu0 %v151
    %177 = vmatpush.msra.mxu0 %v150
    %178 = vmatpush.msra.mxu0 %v149
    %179 = vmatpush.msra.mxu0 %v148
    %180 = vmatpush.msra.mxu0 %v147
    %181 = vmatpush.msra.mxu0 %v146
    %182 = vmatmul.f32.gmra.mxu0 %v145
    %v183 = vpop.f32.mrf.mxu0
    %v184 = vadd.f32 %v164, %v183
    %185 = vdwg.mxu0
    %v186 = vlaneseq
    %v187 = vand.u32 %v186, 127
    %vm188 = vcmp.ge.s32.totalorder %v187, 8
    %vm189 = vcmp.lt.s32.totalorder %v187, 16
    %vm190 = vmand %vm188, %vm189
    %v191 = vmax.f32 %v184, -20.0
    %v192 = vmin.f32 %v191, 10.0
    %v193 = vsel %vm190, %v192, %v184
    %194 = vst [vmem:[%s7] sm:$0xff] %v193
    // Predicated region
    $region42: #{policy_forward.1} parent=1 // pred_check
      _
    $region43: #{policy_forward.1} parent=1 // pred_check_branch
      %196 = sbr.rel (0) target = $region45
    $region44: #{policy_forward.1} parent=1 // pred_region
      _
    $region45: #{policy_forward.1} parent=1 // pred_fallthru
      _
    // Predicated region
    $region46: #{policy_forward.1} parent=1 // pred_check
      _
    $region47: #{policy_forward.1} parent=1 // pred_check_branch
      %198 = sbr.rel (0) target = $region49
    $region48: #{policy_forward.1} parent=1 // pred_region
      _
    $region49: #{policy_forward.1} parent=1 // pred_fallthru
      _
    %199 = vsyncpa [#allocation3], 1
    %200 = vsyncpa [#allocation5], 1

</llo_original>
